<compile_context>
chip_gen: v5e
topology: v5e:2x2
jax: 0.10.0
libtpu: 0.0.40
codegen_flags: <defaults>
</compile_context>

<pallas_src>
import jax
import jax.numpy as jnp
from jax.experimental import pallas as pl
from jax.experimental.pallas import tpu as pltpu


def _snorm_kernel(x_ref, gamma_ref, beta_ref, o_ref):
    # x_ref/o_ref: (1, N, Lb) ; gamma_ref/beta_ref: (1, Lb)
    x = x_ref[0].astype(jnp.float32)                 # (N, Lb)
    n = x.shape[0]

    # One pass over the tile for the statistics.
    s = jnp.sum(x, axis=0, keepdims=True)            # (1, Lb)
    ss = jnp.sum(x * x, axis=0, keepdims=True)       # (1, Lb)
    mean = s * (1.0 / n)
    # Unbiased (ddof=1) variance: (sum(x^2) - n*mean^2) / (n - 1)
    var = (ss - mean * s) * (1.0 / (n - 1))
    inv = jax.lax.rsqrt(var + 1e-5)

    # out = (x - mean) * inv * gamma + beta  ==  x * scale + shift
    scale = gamma_ref[...].astype(jnp.float32) * inv          # (1, Lb)
    shift = beta_ref[...].astype(jnp.float32) - mean * scale  # (1, Lb)
    o_ref[0] = (x * scale + shift).astype(o_ref.dtype)


def snorm(x, gamma, beta, *, lane_block=None):
    """SNorm forward. x: (B, C, N, T); gamma, beta: (C,). Returns (B, C, N, T)."""
    B, C, N, T = x.shape
    if N < 2:
        # Unbiased variance divides by N-1.
        raise ValueError("SNorm requires N >= 2 along the node axis.")
    L = C * T

    # Lane-dense kernel layout: (B, N, C*T).
    xr = jnp.transpose(x, (0, 2, 1, 3)).reshape(B, N, L)
    gamma_l = jnp.repeat(gamma, T).reshape(1, L)   # gamma_l[c*T + t] = gamma[c]
    beta_l = jnp.repeat(beta, T).reshape(1, L)

    # Cap each pipelined buffer at ~2 MiB: (in + out) x double-buffering then
    # uses <= ~8 MiB, comfortably within scoped VMEM on v5e/v6e/v7x while
    # still large enough (>= 128 dense lanes) to sit on the HBM roofline.
    if lane_block is None:
        itemsize = jnp.dtype(x.dtype).itemsize
        target_block_bytes = 2 << 20
        max_lanes = max(128, (target_block_bytes // (N * itemsize)) // 128 * 128)
        lane_block = L if L <= max_lanes else max_lanes
    n_lane_blocks = pl.cdiv(L, lane_block)

    out = pl.pallas_call(
        _snorm_kernel,
        out_shape=jax.ShapeDtypeStruct((B, N, L), x.dtype),
        grid=(B, n_lane_blocks),
        in_specs=[
            pl.BlockSpec((1, N, lane_block), lambda b, j: (b, 0, j)),  # x
            pl.BlockSpec((1, lane_block), lambda b, j: (0, j)),        # gamma
            pl.BlockSpec((1, lane_block), lambda b, j: (0, j)),        # beta
        ],
        out_specs=pl.BlockSpec((1, N, lane_block), lambda b, j: (b, 0, j)),
        compiler_params=pltpu.CompilerParams(
            dimension_semantics=("parallel", "parallel")),
    )(xr, gamma_l, beta_l)

    # Back to the module's (B, C, N, T) layout.
    return out.reshape(B, N, C, T).transpose(0, 2, 1, 3)


def snorm_ref(x, gamma, beta):
    mean = jnp.mean(x, axis=2, keepdims=True)
    var = jnp.var(x, axis=2, keepdims=True, ddof=1)
    x_norm = (x - mean) / jnp.sqrt(var + 1e-5)
    return x_norm * gamma.reshape(1, -1, 1, 1) + beta.reshape(1, -1, 1, 1)


if __name__ == "__main__":
    B, C, N, T = 2, 4, 16, 16

    key = jax.random.PRNGKey(0)
    kx, kg, kb = jax.random.split(key, 3)
    x = jax.random.normal(kx, (B, C, N, T), dtype=jnp.float32)
    # Non-trivial affine parameters so the gamma/beta path is exercised
    # (the module itself initializes gamma=1, beta=0).
    gamma = 1.0 + 0.1 * jax.random.normal(kg, (C,), dtype=jnp.float32)
    beta = 0.1 * jax.random.normal(kb, (C,), dtype=jnp.float32)

    out = jax.block_until_ready(snorm(x, gamma, beta))
    ref = snorm_ref(x, gamma, beta)

    assert out.shape == (B, C, N, T)
    assert jnp.allclose(out, ref, atol=1e-4, rtol=1e-4), float(
        jnp.max(jnp.abs(out - ref)))

    print("KERNEL_OK")
</pallas_src>

<mosaic_0001>
module attributes {stable_mosaic.version = 11 : i64} {
  func.func @_snorm_kernel(%arg0: i32, %arg1: i32, %arg2: memref<1x16x64xf32, #tpu.memory_space<vmem>>, %arg3: memref<1x64xf32, #tpu.memory_space<vmem>>, %arg4: memref<1x64xf32, #tpu.memory_space<vmem>>, %arg5: memref<1x16x64xf32, #tpu.memory_space<vmem>>) attributes {dimension_semantics = [#tpu.dimension_semantics<parallel>, #tpu.dimension_semantics<parallel>], iteration_bounds = array<i64: 2, 1>, scalar_prefetch = 0 : i64, scratch_operands = 0 : i64, tpu.core_type = #tpu.core_type<tc>, window_params = [{transform_indices = @transform_0, window_bounds = array<i64: 1, 16, 64>}, {transform_indices = @transform_1, window_bounds = array<i64: 1, 64>}, {transform_indices = @transform_2, window_bounds = array<i64: 1, 64>}, {transform_indices = @transform_3, window_bounds = array<i64: 1, 16, 64>}]} {
    %c0 = arith.constant 0 : index
    %c0_0 = arith.constant 0 : index
    %c0_1 = arith.constant 0 : index
    %0 = vector.load %arg2[%c0, %c0_0, %c0_1] : memref<1x16x64xf32, #tpu.memory_space<vmem>>, vector<1x16x64xf32>
    %1 = vector.shape_cast %0 : vector<1x16x64xf32> to vector<16x64xf32>
    %cst = arith.constant dense<0.000000e+00> : vector<64xf32>
    %2 = vector.multi_reduction <add>, %1, %cst [0] : vector<16x64xf32> to vector<64xf32>
    %3 = vector.shape_cast %2 : vector<64xf32> to vector<1x64xf32>
    %4 = arith.mulf %1, %1 : vector<16x64xf32>
    %cst_2 = arith.constant dense<0.000000e+00> : vector<64xf32>
    %5 = vector.multi_reduction <add>, %4, %cst_2 [0] : vector<16x64xf32> to vector<64xf32>
    %6 = vector.shape_cast %5 : vector<64xf32> to vector<1x64xf32>
    %cst_3 = arith.constant 6.250000e-02 : f32
    %7 = vector.broadcast %cst_3 : f32 to vector<1x64xf32>
    %8 = arith.mulf %3, %7 : vector<1x64xf32>
    %9 = arith.mulf %8, %3 : vector<1x64xf32>
    %10 = arith.subf %6, %9 : vector<1x64xf32>
    %cst_4 = arith.constant 0.0666666701 : f32
    %11 = vector.broadcast %cst_4 : f32 to vector<1x64xf32>
    %12 = arith.mulf %10, %11 : vector<1x64xf32>
    %cst_5 = arith.constant 9.99999974E-6 : f32
    %13 = vector.broadcast %cst_5 : f32 to vector<1x64xf32>
    %14 = arith.addf %12, %13 : vector<1x64xf32>
    %15 = math.rsqrt %14 : vector<1x64xf32>
    %c0_6 = arith.constant 0 : index
    %c0_7 = arith.constant 0 : index
    %16 = vector.load %arg3[%c0_6, %c0_7] : memref<1x64xf32, #tpu.memory_space<vmem>>, vector<1x64xf32>
    %17 = arith.mulf %16, %15 : vector<1x64xf32>
    %c0_8 = arith.constant 0 : index
    %c0_9 = arith.constant 0 : index
    %18 = vector.load %arg4[%c0_8, %c0_9] : memref<1x64xf32, #tpu.memory_space<vmem>>, vector<1x64xf32>
    %19 = arith.mulf %8, %17 : vector<1x64xf32>
    %20 = arith.subf %18, %19 : vector<1x64xf32>
    %21 = vector.broadcast %17 : vector<1x64xf32> to vector<16x64xf32>
    %22 = arith.mulf %1, %21 : vector<16x64xf32>
    %23 = vector.broadcast %20 : vector<1x64xf32> to vector<16x64xf32>
    %24 = arith.addf %22, %23 : vector<16x64xf32>
    %c0_10 = arith.constant 0 : index
    %c0_11 = arith.constant 0 : index
    %c0_12 = arith.constant 0 : index
    %25 = vector.load %arg5[%c0_10, %c0_11, %c0_12] : memref<1x16x64xf32, #tpu.memory_space<vmem>>, vector<1x16x64xf32>
    %26 = vector.shape_cast %25 : vector<1x16x64xf32> to vector<16x64xf32>
    %27 = vector.shape_cast %24 : vector<16x64xf32> to vector<1x16x64xf32>
    tpu.vector_store %arg5[%c0_10, %c0_11, %c0_12], %27 {strides = array<i32>} : memref<1x16x64xf32, #tpu.memory_space<vmem>>, vector<1x16x64xf32>,
    return
  }
  func.func @transform_0(%arg0: i32, %arg1: i32) -> (i32, i32, i32) {
    %c0_i32 = arith.constant 0 : i32
    %c0_i32_0 = arith.constant 0 : i32
    return %arg0, %c0_i32, %arg1 : i32, i32, i32
  }
  func.func @transform_1(%arg0: i32, %arg1: i32) -> (i32, i32) {
    %c0_i32 = arith.constant 0 : i32
    %c0_i32_0 = arith.constant 0 : i32
    return %c0_i32, %arg1 : i32, i32
  }
  func.func @transform_2(%arg0: i32, %arg1: i32) -> (i32, i32) {
    %c0_i32 = arith.constant 0 : i32
    %c0_i32_0 = arith.constant 0 : i32
    return %c0_i32, %arg1 : i32, i32
  }
  func.func @transform_3(%arg0: i32, %arg1: i32) -> (i32, i32, i32) {
    %c0_i32 = arith.constant 0 : i32
    %c0_i32_0 = arith.constant 0 : i32
    return %arg0, %c0_i32, %arg1 : i32, i32, i32
  }
}

</mosaic_0001>

<llo_original>
// kernel: tpu_custom_call.1
$region0: #{tpu_custom_call.1}
  #allocation0 [shape = 'u32[]', space=smem, size = 0x4, offset = 0x4, fixed_abs, tag = 'smem constant byte address 0x4 - core index']
  #allocation1 [shape = 'u32[72,128]{1,0:T(1,128)}', space=vmem, size = 0x9000, scoped, tag = 'internal scratch']
  %s0 = inlined_call_operand.hbm [shape: f32[2,16,64], index: 0, kind: input, shape index: {}]
  %s1 = inlined_call_operand.hbm [shape: f32[1,64], index: 1, kind: input, shape index: {}]
  %s2 = inlined_call_operand.vmem [shape: f32[1,64], index: 2, kind: input, shape index: {}]
  %s3 = inlined_call_operand.hbm [shape: f32[2,16,64], index: 3, kind: output, shape index: {}]
  %s4 = sld [smem:[#allocation0]]
  $region53: #{tpu_custom_call.1} parent=0
    _
  %s6 = ssub.s32 1, %s4
  %s7 = scalar_select 0, %s6, %s4
  $region1: #{tpu_custom_call.1} parent=0
    #allocation2 [shape = 'u8[16384]{0}', space=vmem, size = 0x4000, scoped, tag = 'input window, operand 0']
    #allocation3 [shape = 's32[2]{0}', space=sflag, size = 0x8, scoped, tag = 'scoped memory for tpu_custom_call.1']
    #allocation4 [shape = 's32[2]{0}', space=sflag, size = 0x8, scoped, tag = 'scoped memory for tpu_custom_call.1']
    #allocation5 [shape = 'u8[512]{0}', space=vmem, size = 0x400, scoped, tag = 'input window, operand 1, single buffered']
    #allocation6 [shape = 's32[1]{0}', space=sflag, size = 0x4, scoped, tag = 'scoped memory for tpu_custom_call.1']
    #allocation7 [shape = 'u8[16384]{0}', space=vmem, size = 0x4000, scoped, tag = 'output window, operand 0']
    %8 = vsyncpa [#allocation3], 0
    %s9 = scalar_lea.sflag [#allocation3], 1
    %10 = vsyncpa %s9, 0
    %11 = vsyncpa [#allocation6], 0
    %12 = vsyncpa [#allocation4], 0
    %s13 = scalar_lea.sflag [#allocation4], 1
    %14 = vsyncpa %s13, 0
    loop: start=0, step=1, limit=4
    $region2: #{tpu_custom_call.1} parent=1 // loop_pre_header
      _
    $region3: #{tpu_custom_call.1} parent=1 // loop_header
      %s16 = sphi 0, %s20
      %p17 = scmp.ge.s32.totalorder %s16, 4
      %s23 = sphi 0, %s35
      %s24 = sphi 0, %s31
      %s25 = sphi 0, %s23
      %s26 = sphi 0, %s24
      %s27 = sphi 0, %s25
      %s28 = sphi 0, %s26
      %s40 = sphi 0, %s42
      %s43 = sphi 0, %s40
      %s44 = sphi 0, %s43
      %s60 = sphi 0, %s44
      %s66 = sphi 0, %s68
      %s69 = sphi 0, %s66
      %s70 = sphi 0, %s69
      %s86 = sphi 0, %s70
      %s92 = sphi 0, %s94
      %s95 = sphi 0, %s92
      %s96 = sphi 0, %s95
      %s112 = sphi 0, %s96
      %s120 = sphi 0, %s122
      %s123 = sphi 0, %s120
      %s124 = sphi 0, %s123
      %s140 = sphi 0, %s124
    $region4: #{tpu_custom_call.1} parent=1 // loop_header_branch
      %19 = sbr.rel (%p17) target = $region8
    $region5: #{tpu_custom_call.1} parent=1 // loop_body
      %s21 = ssub.s32 %s16, 1
      %s22 = ssub.s32 %s16, 2
      %s29 = sadd.s32 1, %s24
      %p30 = scmp.ge.s32.totalorder %s29, 1
      %s31 = scalar_select %p30, 0, %s29
      %s32 = sadd.s32 1, %s23
      %s33 = scalar_select %p30, %s32, %s23
      %p34 = scmp.ge.s32.totalorder %s33, 2
      %s35 = scalar_select %p34, 0, %s33
      %s36 = ssub.s32 %s23, %s35
      %s37 = ssub.s32 %s24, %s31
      %s38 = sor.u32 %s36, %s37
      %p39 = scmp.eq.s32.totalorder %s38, 0
      %s41 = sadd.s32 %s40, 1
      %s42 = scalar_select %p39, %s40, %s41
      %p45 = pneg %p39
      %p46 = scmp.eq.s32.totalorder %s16, 1
      %p47 = por %p45, %p46
      %p48 = scmp.ne.s32.totalorder %s40, %s43
      %p49 = scmp.eq.s32.totalorder %s16, 0
      %p50 = por %p48, %p49
      %p51 = scmp.ne.s32.totalorder %s40, %s43
      %p52 = scmp.eq.s32.totalorder %s21, 1
      %p53 = por %p51, %p52
      %p54 = scmp.ne.s32.totalorder %s43, %s44
      %p55 = scmp.eq.s32.totalorder %s21, 0
      %p56 = por %p54, %p55
      %p57 = scmp.ne.s32.totalorder %s43, %s44
      %p58 = scmp.eq.s32.totalorder %s22, 1
      %p59 = por %p57, %p58
      %p61 = scmp.ne.s32.totalorder %s44, %s60
      %p62 = scmp.eq.s32.totalorder %s22, 0
      %p63 = por %p61, %p62
      %s64 = ssub.s32 %s24, %s31
      %p65 = scmp.eq.s32.totalorder %s64, 0
      %s67 = sadd.s32 %s66, 1
      %s68 = scalar_select %p65, %s66, %s67
      %p71 = pneg %p65
      %p72 = scmp.eq.s32.totalorder %s16, 1
      %p73 = por %p71, %p72
      %p74 = scmp.ne.s32.totalorder %s66, %s69
      %p75 = scmp.eq.s32.totalorder %s16, 0
      %p76 = por %p74, %p75
      %p77 = scmp.ne.s32.totalorder %s66, %s69
      %p78 = scmp.eq.s32.totalorder %s21, 1
      %p79 = por %p77, %p78
      %p80 = scmp.ne.s32.totalorder %s69, %s70
      %p81 = scmp.eq.s32.totalorder %s21, 0
      %p82 = por %p80, %p81
      %p83 = scmp.ne.s32.totalorder %s69, %s70
      %p84 = scmp.eq.s32.totalorder %s22, 1
      %p85 = por %p83, %p84
      %p87 = scmp.ne.s32.totalorder %s70, %s86
      %p88 = scmp.eq.s32.totalorder %s22, 0
      %p89 = por %p87, %p88
      %s90 = ssub.s32 %s24, %s31
      %p91 = scmp.eq.s32.totalorder %s90, 0
      %s93 = sadd.s32 %s92, 1
      %s94 = scalar_select %p91, %s92, %s93
      %p97 = pneg %p91
      %p98 = scmp.eq.s32.totalorder %s16, 1
      %p99 = por %p97, %p98
      %p100 = scmp.ne.s32.totalorder %s92, %s95
      %p101 = scmp.eq.s32.totalorder %s16, 0
      %p102 = por %p100, %p101
      %p103 = scmp.ne.s32.totalorder %s92, %s95
      %p104 = scmp.eq.s32.totalorder %s21, 1
      %p105 = por %p103, %p104
      %p106 = scmp.ne.s32.totalorder %s95, %s96
      %p107 = scmp.eq.s32.totalorder %s21, 0
      %p108 = por %p106, %p107
      %p109 = scmp.ne.s32.totalorder %s95, %s96
      %p110 = scmp.eq.s32.totalorder %s22, 1
      %p111 = por %p109, %p110
      %p113 = scmp.ne.s32.totalorder %s96, %s112
      %p114 = scmp.eq.s32.totalorder %s22, 0
      %p115 = por %p113, %p114
      %s116 = ssub.s32 %s23, %s35
      %s117 = ssub.s32 %s24, %s31
      %s118 = sor.u32 %s116, %s117
      %p119 = scmp.eq.s32.totalorder %s118, 0
      %s121 = sadd.s32 %s120, 1
      %s122 = scalar_select %p119, %s120, %s121
      %p125 = pneg %p119
      %p126 = scmp.eq.s32.totalorder %s16, 1
      %p127 = por %p125, %p126
      %p128 = scmp.ne.s32.totalorder %s120, %s123
      %p129 = scmp.eq.s32.totalorder %s16, 0
      %p130 = por %p128, %p129
      %p131 = scmp.ne.s32.totalorder %s120, %s123
      %p132 = scmp.eq.s32.totalorder %s21, 1
      %p133 = por %p131, %p132
      %p134 = scmp.ne.s32.totalorder %s123, %s124
      %p135 = scmp.eq.s32.totalorder %s21, 0
      %p136 = por %p134, %p135
      %p137 = scmp.ne.s32.totalorder %s123, %s124
      %p138 = scmp.eq.s32.totalorder %s22, 1
      %p139 = por %p137, %p138
      %p141 = scmp.ne.s32.totalorder %s124, %s140
      %p142 = scmp.eq.s32.totalorder %s22, 0
      %p143 = por %p141, %p142
      %p144 = scmp.le.s32.totalorder 1, %s16
      %p145 = scmp.lt.s32.totalorder %s16, 3
      %p146 = pnand %p144, %p145
      %p147 = pneg %p146
      // Predicated region
      $region9: #{tpu_custom_call.1} parent=5 // pred_check
        _
      $region10: #{tpu_custom_call.1} parent=5 // pred_check_branch
        %149 = sbr.rel (%p146) target = $region12
      $region11: #{tpu_custom_call.1} parent=5 // pred_region
        %s150 = ssub.s32 %s16, 1
        // Predicated region
        $region13: #{tpu_custom_call.1} parent=11 // pred_check
          %p151 = pneg %p82
        $region14: #{tpu_custom_call.1} parent=11 // pred_check_branch
          %153 = sbr.rel (%p151) target = $region16
        $region15: #{tpu_custom_call.1} parent=11 // pred_region
          %155 = vsyncadd [#allocation6], 0
          %s156 = scalar_lea.hbm %s1, %s26
          %s158 = sshll.u32 %s156, 4
          %s159 = int_to_ptr.hbm [resolvable:$true] %s158
          %s160 = sshll.u32 [#allocation5], 4
          %s161 = int_to_ptr.vmem [resolvable:$true] %s160
          %163 = dma.hbm_to_vmem [thread:$0]  %s159, 16, %s161, [#allocation6]
        $region16: #{tpu_custom_call.1} parent=11 // pred_fallthru
          _
        // Predicated region
        $region17: #{tpu_custom_call.1} parent=11 // pred_check
          %p164 = pneg %p108
        $region18: #{tpu_custom_call.1} parent=11 // pred_check_branch
          %166 = sbr.rel (%p164) target = $region20
        $region19: #{tpu_custom_call.1} parent=11 // pred_region
          %p167 = scmp.lt.s32.totalorder %s26, 0
          %s168 = scalar_select %p167, %s26, 0
          %s169 = scalar_lea.vmem %s2, %s168
        $region20: #{tpu_custom_call.1} parent=11 // pred_fallthru
          _
      $region12: #{tpu_custom_call.1} parent=5 // pred_fallthru
        _
      %p170 = scmp.lt.s32.totalorder %s16, 2
      // Predicated region
      $region21: #{tpu_custom_call.1} parent=5 // pred_check
        %p171 = pneg %p170
      $region22: #{tpu_custom_call.1} parent=5 // pred_check_branch
        %173 = sbr.rel (%p171) target = $region24
      $region23: #{tpu_custom_call.1} parent=5 // pred_region
        // Predicated region
        $region25: #{tpu_custom_call.1} parent=23 // pred_check
          %p174 = pneg %p50
        $region26: #{tpu_custom_call.1} parent=23 // pred_check_branch
          %176 = sbr.rel (%p174) target = $region28
        $region27: #{tpu_custom_call.1} parent=23 // pred_region
          %s177 = sand.u32 %s40, 1
          %s178 = scalar_lea.sflag [#allocation3], %s177
          %s179 = sand.u32 %s40, 1
          %s180 = smul.addr %s179, 16
          %s181 = scalar_lea.vmem [#allocation2], %s180
          %183 = vsyncadd %s178, 0
          %s184 = smul.addr %s23, 2
          %s185 = sadd.s32 %s24, %s184
          %s186 = smul.addr %s185, 8
          %s187 = scalar_lea.hbm %s0, %s186
          %s188 = sshll.u32 %s187, 4
          %s189 = int_to_ptr.hbm [resolvable:$true] %s188
          %s190 = sshll.u32 %s181, 4
          %s191 = int_to_ptr.vmem [resolvable:$true] %s190
          %196 = dma.hbm_to_vmem [thread:$0]  %s189, 256, %s191, %s178, 128, 128, 8
        $region28: #{tpu_custom_call.1} parent=23 // pred_fallthru
          _
      $region24: #{tpu_custom_call.1} parent=5 // pred_fallthru
        _
      %p197 = scmp.le.s32.totalorder 1, %s16
      %p198 = scmp.lt.s32.totalorder %s16, 3
      %p199 = pnand %p197, %p198
      %p200 = pneg %p199
      // Predicated region
      $region29: #{tpu_custom_call.1} parent=5 // pred_check
        _
      $region30: #{tpu_custom_call.1} parent=5 // pred_check_branch
        %202 = sbr.rel (%p199) target = $region32
      $region31: #{tpu_custom_call.1} parent=5 // pred_region
        %s203 = ssub.s32 %s16, 1
        %s204 = sand.u32 %s43, 1
        %s205 = scalar_lea.sflag [#allocation3], %s204
        %s206 = sand.u32 %s43, 1
        %s207 = smul.addr %s206, 16
        %s208 = scalar_lea.vmem [#allocation2], %s207
        // Predicated region
        $region33: #{tpu_custom_call.1} parent=31 // pred_check
          %p209 = pneg %p56
        $region34: #{tpu_custom_call.1} parent=31 // pred_check_branch
          %211 = sbr.rel (%p209) target = $region36
        $region35: #{tpu_custom_call.1} parent=31 // pred_region
          %213 = dma.done %s205, 256
        $region36: #{tpu_custom_call.1} parent=31 // pred_fallthru
          _
        // Predicated region
        $region37: #{tpu_custom_call.1} parent=31 // pred_check
          %p214 = pneg %p82
        $region38: #{tpu_custom_call.1} parent=31 // pred_check_branch
          %216 = sbr.rel (%p214) target = $region40
        $region39: #{tpu_custom_call.1} parent=31 // pred_region
          %218 = dma.done [#allocation6], 16
        $region40: #{tpu_custom_call.1} parent=31 // pred_fallthru
          _
        %s219 = sand.u32 %s43, 1
        %s220 = scalar_lea.sflag [#allocation3], %s219
        %s221 = sand.u32 %s43, 1
        %s222 = smul.addr %s221, 16
        %s223 = scalar_lea.vmem [#allocation2], %s222
        %p224 = pneg %p56
        %p225 = pneg %p53
        %p226 = pneg %p82
        %p227 = pneg %p79
        %p228 = scmp.lt.s32.totalorder %s26, 0
        %s229 = scalar_select %p228, %s26, 0
        %s230 = scalar_lea.vmem %s2, %s229
        %p231 = pneg %p108
        %p232 = pneg %p105
        %p233 = pneg %p136
        %p234 = pneg %p133
        %s235 = sand.u32 %s123, 1
        %s236 = scalar_lea.sflag [#allocation4], %s235
        %s237 = sand.u32 %s123, 1
        %s238 = smul.addr %s237, 16
        %s239 = scalar_lea.vmem [#allocation7], %s238
        %p240 = scmp.lt.s32.totalorder %s26, 0
        %s241 = scalar_select %p240, %s26, 0
        %s242 = scalar_lea.vmem %s2, %s241
        %v243 = vld [vmem:[%s208] sm:$0xff]
        %v244 = vld [vmem:[%s208 + $0x8] sm:$0xff]
        %vm245 = vcmask 523264
        %v246 = vsel %vm245, %v243, 0.0
        %v247 = vsel %vm245, %v244, 0.0
        %v248 = vadd.f32 %v246, %v247
        %v249 = vrot.slane %v248, 4
        %v250 = vadd.f32 %v248, %v249
        %v251 = vrot.slane %v250, 2
        %v252 = vadd.f32 %v250, %v251
        %v253 = vrot.slane %v252, 1
        %v254 = vadd.f32 %v252, %v253
        %v255 = vmul.f32 %v243, %v243
        %v256 = vmul.f32 %v244, %v244
        %v257 = vsel %vm245, %v255, 0.0
        %v258 = vsel %vm245, %v256, 0.0
        %v259 = vadd.f32 %v257, %v258
        %v260 = vrot.slane %v259, 4
        %v261 = vadd.f32 %v259, %v260
        %v262 = vrot.slane %v261, 2
        %v263 = vadd.f32 %v261, %v262
        %v264 = vrot.slane %v263, 1
        %v265 = vadd.f32 %v263, %v264
        %v266 = vmul.f32 %v254, 0.0625
        %v267 = vmul.f32 %v266, %v254
        %v268 = vsub.f32 %v265, %v267
        %v269 = vmul.f32 %v268, 0.06666667
        %v270 = vadd.f32 %v269, 1e-05
        %v271 = vrsqrt.pop %v270
        %v272 = vmul.f32 %v271, %v270
        %v273 = vmul.f32 %v272, %v271
        %v274 = vmul.f32 0.5, %v273
        %v275 = vsub.f32 1.5, %v274
        %v276 = vmul.f32 %v271, %v275
        %vm277 = vweird.f32 %v270
        %vm278 = vweird.f32 %v271
        %vm279 = vmor %vm277, %vm278
        %v280 = vsel %vm279, %v271, %v276
        %v281 = vld [vmem:[#allocation5] sm:$0x1]
        %v282 = vmul.f32 %v281, %v280
        %v283 = vld [vmem:[%s242] sm:$0x1]
        %v284 = vmul.f32 %v266, %v282
        %v285 = vsub.f32 %v283, %v284
        %v287 = vperm.slane %v282, 0
        %v289 = vmul.f32 %v243, %v287
        %v290 = vmul.f32 %v244, %v287
        %v292 = vperm.slane %v285, 0
        %v294 = vadd.f32 %v289, %v292
        %v295 = vadd.f32 %v290, %v292
        %296 = vst.msk [vmem:[%s239] sm:$0xff] %vm245, %v294
        %297 = vst.msk [vmem:[%s239 + $0x8] sm:$0xff] %vm245, %v295
        %s298 = sand.u32 %s123, 1
        %s299 = scalar_lea.sflag [#allocation4], %s298
        %s300 = sand.u32 %s123, 1
        %s301 = smul.addr %s300, 16
        %s302 = scalar_lea.vmem [#allocation7], %s301
        // Predicated region
        $region41: #{tpu_custom_call.1} parent=31 // pred_check
          %p303 = pneg %p133
        $region42: #{tpu_custom_call.1} parent=31 // pred_check_branch
          %305 = sbr.rel (%p303) target = $region44
        $region43: #{tpu_custom_call.1} parent=31 // pred_region
          %307 = vsyncadd %s299, 0
          %s308 = smul.addr %s25, 2
          %s309 = sadd.s32 %s26, %s308
          %s310 = smul.addr %s309, 8
          %s311 = scalar_lea.hbm %s3, %s310
          %s312 = sshll.u32 %s302, 4
          %s313 = int_to_ptr.vmem [resolvable:$true] %s312
          %s314 = sshll.u32 %s311, 4
          %s315 = int_to_ptr.hbm [resolvable:$true] %s314
          %320 = dma.vmem_to_hbm [thread:$0]  %s313, 256, %s315, %s299, 128, 128, 8
        $region44: #{tpu_custom_call.1} parent=31 // pred_fallthru
          _
      $region32: #{tpu_custom_call.1} parent=5 // pred_fallthru
        _
      %p321 = scmp.le.s32.totalorder 2, %s16
      // Predicated region
      $region45: #{tpu_custom_call.1} parent=5 // pred_check
        %p322 = pneg %p321
      $region46: #{tpu_custom_call.1} parent=5 // pred_check_branch
        %324 = sbr.rel (%p322) target = $region48
      $region47: #{tpu_custom_call.1} parent=5 // pred_region
        %s325 = ssub.s32 %s16, 2
        // Predicated region
        $region49: #{tpu_custom_call.1} parent=47 // pred_check
          %p326 = pneg %p139
        $region50: #{tpu_custom_call.1} parent=47 // pred_check_branch
          %328 = sbr.rel (%p326) target = $region52
        $region51: #{tpu_custom_call.1} parent=47 // pred_region
          %s329 = sand.u32 %s124, 1
          %s330 = scalar_lea.sflag [#allocation4], %s329
          %s331 = sand.u32 %s124, 1
          %s332 = smul.addr %s331, 16
          %s333 = scalar_lea.vmem [#allocation7], %s332
          %335 = dma.done %s330, 256
        $region52: #{tpu_custom_call.1} parent=47 // pred_fallthru
          _
      $region48: #{tpu_custom_call.1} parent=5 // pred_fallthru
        _
    $region6: #{tpu_custom_call.1} parent=1 // loop_footer
      %s20 = sadd.s32 1, %s16
    $region7: #{tpu_custom_call.1} parent=1 // loop_footer_branch
      %15 = sbr.rel target = $region3
    $region8: #{tpu_custom_call.1} parent=1 // loop_exit
      _
    %336 = vsyncpa [#allocation3], 1
    %s337 = scalar_lea.sflag [#allocation3], 1
    %338 = vsyncpa %s337, 1
    %339 = vsyncpa [#allocation6], 1
    %340 = vsyncpa [#allocation4], 1
    %s341 = scalar_lea.sflag [#allocation4], 1
    %342 = vsyncpa %s341, 1

</llo_original>
